<compile_context>
chip_gen: v6e
topology: v6e:2x2x1
jax: 0.10.0
libtpu: 0.0.40
codegen_flags: <defaults>
</compile_context>

<pallas_src>
import functools

import jax
import jax.numpy as jnp
from jax.experimental import pallas as pl
from jax.experimental.pallas import tpu as pltpu


_LANE = 128
_SMALL_C_MAX = 64            # below this many classes, use the [C, B] lane-dense path
_MAX_TILE_LANES = 128 * 1024  # absurdity guards only; the VMEM budget binds first
_MAX_TILE_ROWS = 16 * 1024
_TEMPS = 10                  # allowance (in f32 block copies) for in-kernel temporaries


def _round_up(x, m):
    return (x + m - 1) // m * m


def _sublane_align(dtype):
    # sublane tile grows as the dtype narrows: (8,128) f32, (16,128) bf16, (32,128) i8/fp8
    return max(8, 32 // jnp.dtype(dtype).itemsize)


def _vmem_limit_bytes():
    try:
        cap = int(pltpu.get_tpu_info().vmem_capacity_bytes)
    except Exception:
        cap = 64 * 1024 * 1024
    # v5e/v6e report 128 MiB per TensorCore -> use half (64 MiB) and actually fill it.
    # v7x has 64 MiB per TensorCore -> leave ~1/8 headroom (~56 MiB).
    # NOTE: assumes vmem_capacity_bytes is per-TensorCore; if a platform ever reports
    # per-chip capacity the result still never exceeds 64 MiB.
    if cap >= 96 * 1024 * 1024:
        return cap // 2
    return (cap * 7) // 8


# ----------------------------------------------------------------------------
# Kernels
# ----------------------------------------------------------------------------
def _emd_small_c_kernel(out_ref, tgt_ref, tri_ref, part_ref):
    """Lane-dense path: refs are [C, TB] (classes on sublanes, batch on lanes)."""
    o = out_ref[...].astype(jnp.float32)
    t = tgt_ref[...].astype(jnp.float32)

    def _softmax_cols(x):
        m = jnp.max(x, axis=0, keepdims=True)
        e = jnp.exp(x - m)
        s = jnp.sum(e, axis=0, keepdims=True)
        return e / s                       # exact denominator (correctness review)

    diff = _softmax_cols(o) - _softmax_cols(t)          # [C, TB]

    # Inclusive prefix sum over classes (sublane axis) via the resident
    # lower-triangular ones matrix: cum[i, b] = sum_{j<=i} diff[j, b].
    # TODO(synk): replace this tiny MXU matmul with a log2(C) masked pltpu.roll
    # sublane scan once its lowering is validated for non-8-aligned C.
    cum = jnp.dot(tri_ref[...], diff, preferred_element_type=jnp.float32)

    # Per-tile partial sum into a lane-dense (1, 8, 128) output block.
    # TODO(synk): emit per-lane column sums instead of a full scalar reduce once
    # the kernel is compute-bound (minor; few grid steps at these tile sizes).
    partial = jnp.sum(cum * cum)
    part_ref[...] = jnp.broadcast_to(partial, part_ref.shape).astype(jnp.float32)


def _emd_large_c_kernel(out_ref, tgt_ref, tri_ref, part_ref):
    """Row-layout path: refs are [TB, C] (batch on sublanes, classes on lanes)."""
    o = out_ref[...].astype(jnp.float32)
    t = tgt_ref[...].astype(jnp.float32)

    def _softmax_rows(x):
        m = jnp.max(x, axis=1, keepdims=True)
        e = jnp.exp(x - m)
        s = jnp.sum(e, axis=1, keepdims=True)
        return e / s

    diff = _softmax_rows(o) - _softmax_rows(t)           # [TB, C]

    # bf16 hi/lo split: two bf16 MXU passes with f32 accumulation keep ~f32
    # accuracy while avoiding the multi-pass f32-emulated matmul on v5e/v6e.
    d_hi = diff.astype(jnp.bfloat16)
    d_lo = (diff - d_hi.astype(jnp.float32)).astype(jnp.bfloat16)
    tri = tri_ref[...]                                   # [C, C] bf16 upper-triangular 0/1
    cum = (jnp.dot(d_hi, tri, preferred_element_type=jnp.float32)
           + jnp.dot(d_lo, tri, preferred_element_type=jnp.float32))

    partial = jnp.sum(cum * cum)
    part_ref[...] = jnp.broadcast_to(partial, part_ref.shape).astype(jnp.float32)


# ----------------------------------------------------------------------------
# Wrapper
# ----------------------------------------------------------------------------
@functools.partial(jax.jit, static_argnames=("tile_b",))
def emd_loss(output, target, tile_b=None):
    """output, target: [B, C] arrays. Returns scalar float32 loss."""
    assert output.shape == target.shape and output.ndim == 2
    B, C = output.shape

    vmem_limit = _vmem_limit_bytes()
    usable = (vmem_limit * 7) // 10        # ~70% for data blocks; rest is headroom

    compiler_params = pltpu.CompilerParams(
        dimension_semantics=("parallel",),  # 2-TensorCore sharding on v7x
        vmem_limit_bytes=vmem_limit,
    )
    out_block = pl.BlockSpec((1, 8, 128), lambda i: (i, 0, 0))

    if C <= _SMALL_C_MAX:
        # --- lane-dense small-C path: classes on sublanes, batch on lanes ----
        c_sub = _round_up(C, 8)
        tri_bytes = _round_up(C, 8) * _round_up(C, _LANE) * 4     # f32, one buffer
        budget = usable - 2 * tri_bytes                            # tri is double-buffered
        per_lane_bytes = (4 + _TEMPS) * c_sub * 4                  # 4 input bufs + f32 temps
        tile = budget // per_lane_bytes if tile_b is None else int(tile_b)
        tile = min(tile, _MAX_TILE_LANES)
        tile = max(_LANE, (tile // _LANE) * _LANE)
        total = _round_up(B, _LANE)
        tile = min(tile, total)
        if total >= 2 * _LANE:                                     # keep both v7x TCs busy
            tile = min(tile, _round_up((total + 1) // 2, _LANE))
        b_pad = _round_up(B, tile)
        num_tiles = b_pad // tile

        o_t, t_t = output.T, target.T                              # [C, B]
        if b_pad != B:
            pad = ((0, 0), (0, b_pad - B))
            # identical zero columns in both inputs -> softmax diff == 0 -> contribute 0
            o_t = jnp.pad(o_t, pad)
            t_t = jnp.pad(t_t, pad)

        idx = jnp.arange(C, dtype=jnp.int32)
        tri = (idx[None, :] <= idx[:, None]).astype(jnp.float32)   # lower-tri: cum = L @ diff

        partials = pl.pallas_call(
            _emd_small_c_kernel,
            out_shape=jax.ShapeDtypeStruct((num_tiles, 8, 128), jnp.float32),
            grid=(num_tiles,),
            in_specs=[
                pl.BlockSpec((C, tile), lambda i: (0, i)),
                pl.BlockSpec((C, tile), lambda i: (0, i)),
                pl.BlockSpec((C, C), lambda i: (0, 0)),            # resident across the grid
            ],
            out_specs=out_block,
            compiler_params=compiler_params,
        )(o_t, t_t, tri)
    else:
        # --- row layout for larger C: batch on sublanes, classes on lanes ----
        align = _sublane_align(output.dtype)
        c_lanes = _round_up(C, _LANE)
        tri_bytes = _round_up(C, 16) * c_lanes * 2                 # bf16, one buffer
        # TODO(synk): for very large C (2*C^2 bf16 bytes pressuring VMEM), switch to a
        # blocked prefix-sum (KxC tri panels + carry column) and single-buffer the panel.
        budget = usable - 2 * tri_bytes
        per_row_bytes = (4 + _TEMPS) * c_lanes * 4
        tile = budget // per_row_bytes if tile_b is None else int(tile_b)
        tile = min(tile, _MAX_TILE_ROWS)
        tile = max(align, (tile // align) * align)
        total = _round_up(B, align)
        tile = min(tile, total)
        if total >= 2 * align:                                     # keep both v7x TCs busy
            tile = min(tile, _round_up((total + 1) // 2, align))
        b_pad = _round_up(B, tile)
        num_tiles = b_pad // tile

        o_r, t_r = output, target
        if b_pad != B:
            pad = ((0, b_pad - B), (0, 0))
            o_r = jnp.pad(o_r, pad)
            t_r = jnp.pad(t_r, pad)

        idx = jnp.arange(C, dtype=jnp.int32)
        tri = (idx[:, None] <= idx[None, :]).astype(jnp.bfloat16)  # upper-tri: cum = diff @ U

        partials = pl.pallas_call(
            _emd_large_c_kernel,
            out_shape=jax.ShapeDtypeStruct((num_tiles, 8, 128), jnp.float32),
            grid=(num_tiles,),
            in_specs=[
                pl.BlockSpec((tile, C), lambda i: (i, 0)),
                pl.BlockSpec((tile, C), lambda i: (i, 0)),
                pl.BlockSpec((C, C), lambda i: (0, 0)),            # resident across the grid
            ],
            out_specs=out_block,
            compiler_params=compiler_params,
        )(o_r, t_r, tri)

    # Reduce the per-tile partial sums; normalize by the TRUE element count.
    return jnp.sum(partials[:, 0, 0]) / (B * C)


def _emd_loss_ref(output, target):
    o = jax.nn.softmax(output.astype(jnp.float32), axis=1)
    t = jax.nn.softmax(target.astype(jnp.float32), axis=1)
    cum = jnp.cumsum(o - t, axis=1)
    return jnp.mean(cum * cum)


if __name__ == "__main__":
    key = jax.random.PRNGKey(0)
    keys = jax.random.split(key, 8)

    def _check(o, t, **kw):
        loss = jax.block_until_ready(emd_loss(o, t, **kw))
        ref = jax.block_until_ready(_emd_loss_ref(o, t))
        assert jnp.allclose(loss, ref, atol=1e-5, rtol=2e-3), (loss, ref)

    # 1) small 10-class score distributions, batch of 4 (small-C path, 1 tile)
    _check(jax.random.normal(keys[0], (4, 10), jnp.float32),
           jax.random.normal(keys[1], (4, 10), jnp.float32))

    # 2) bigger batch -> small-C path with >= 2 grid steps (v7x 2-TC split logic)
    _check(jax.random.normal(keys[2], (300, 10), jnp.float32),
           jax.random.normal(keys[3], (300, 10), jnp.float32))

    # 3) explicit tile + zero-padded remainder columns
    _check(jax.random.normal(keys[4], (37, 10), jnp.float32),
           jax.random.normal(keys[5], (37, 10), jnp.float32), tile_b=128)

    # 4) larger class count -> row-layout path with bf16 hi/lo MXU cumsum + row padding
    _check(jax.random.normal(keys[6], (24, 200), jnp.float32),
           jax.random.normal(keys[7], (24, 200), jnp.float32))

    print("KERNEL_OK")
</pallas_src>

<mosaic_0001>
module attributes {stable_mosaic.version = 11 : i64} {
  func.func @_emd_small_c_kernel(%arg0: i32, %arg1: memref<10x128xf32, #tpu.memory_space<vmem>>, %arg2: memref<10x128xf32, #tpu.memory_space<vmem>>, %arg3: memref<10x10xf32, #tpu.memory_space<vmem>>, %arg4: memref<1x8x128xf32, #tpu.memory_space<vmem>>) attributes {dimension_semantics = [#tpu.dimension_semantics<parallel>], iteration_bounds = array<i64: 1>, scalar_prefetch = 0 : i64, scratch_operands = 0 : i64, tpu.core_type = #tpu.core_type<tc>, window_params = [{transform_indices = @transform_0, window_bounds = array<i64: 10, 128>}, {transform_indices = @transform_1, window_bounds = array<i64: 10, 128>}, {pipeline_mode = #tpu.pipeline_mode<synchronous>, transform_indices = @transform_2, window_bounds = array<i64: 10, 10>}, {transform_indices = @transform_3, window_bounds = array<i64: 1, 8, 128>}]} {
    %c0 = arith.constant 0 : index
    %c0_0 = arith.constant 0 : index
    %0 = vector.load %arg1[%c0, %c0_0] : memref<10x128xf32, #tpu.memory_space<vmem>>, vector<10x128xf32>
    %c0_1 = arith.constant 0 : index
    %c0_2 = arith.constant 0 : index
    %1 = vector.load %arg2[%c0_1, %c0_2] : memref<10x128xf32, #tpu.memory_space<vmem>>, vector<10x128xf32>
    %cst = arith.constant dense<0xFF800000> : vector<128xf32>
    %2 = vector.multi_reduction <maximumf>, %0, %cst [0] : vector<10x128xf32> to vector<128xf32>
    %3 = vector.shape_cast %2 : vector<128xf32> to vector<1x128xf32>
    %4 = vector.broadcast %3 : vector<1x128xf32> to vector<10x128xf32>
    %5 = arith.subf %0, %4 : vector<10x128xf32>
    %6 = math.exp %5 : vector<10x128xf32>
    %cst_3 = arith.constant dense<0.000000e+00> : vector<128xf32>
    %7 = vector.multi_reduction <add>, %6, %cst_3 [0] : vector<10x128xf32> to vector<128xf32>
    %8 = vector.shape_cast %7 : vector<128xf32> to vector<1x128xf32>
    %9 = vector.broadcast %8 : vector<1x128xf32> to vector<10x128xf32>
    %10 = arith.divf %6, %9 : vector<10x128xf32>
    %cst_4 = arith.constant dense<0xFF800000> : vector<128xf32>
    %11 = vector.multi_reduction <maximumf>, %1, %cst_4 [0] : vector<10x128xf32> to vector<128xf32>
    %12 = vector.shape_cast %11 : vector<128xf32> to vector<1x128xf32>
    %13 = vector.broadcast %12 : vector<1x128xf32> to vector<10x128xf32>
    %14 = arith.subf %1, %13 : vector<10x128xf32>
    %15 = math.exp %14 : vector<10x128xf32>
    %cst_5 = arith.constant dense<0.000000e+00> : vector<128xf32>
    %16 = vector.multi_reduction <add>, %15, %cst_5 [0] : vector<10x128xf32> to vector<128xf32>
    %17 = vector.shape_cast %16 : vector<128xf32> to vector<1x128xf32>
    %18 = vector.broadcast %17 : vector<1x128xf32> to vector<10x128xf32>
    %19 = arith.divf %15, %18 : vector<10x128xf32>
    %20 = arith.subf %10, %19 : vector<10x128xf32>
    %c0_6 = arith.constant 0 : index
    %c0_7 = arith.constant 0 : index
    %21 = vector.load %arg3[%c0_6, %c0_7] : memref<10x10xf32, #tpu.memory_space<vmem>>, vector<10x10xf32>
    %cst_8 = arith.constant dense<0.000000e+00> : vector<10x128xf32>
    %22 = tpu.matmul %21, %20, %cst_8 {dimension_numbers = #tpu.dot_dimension_numbers<[1], [0], [0], [1], [0, 0, 1, 1], [], []>} : vector<10x10xf32>, vector<10x128xf32>, vector<10x128xf32> -> vector<10x128xf32>
    %23 = arith.mulf %22, %22 : vector<10x128xf32>
    %24 = vector.shape_cast %23 : vector<10x128xf32> to vector<1x10x128xf32>
    %cst_9 = arith.constant dense<0.000000e+00> : vector<1xf32>
    %25 = vector.multi_reduction <add>, %24, %cst_9 [1, 2] : vector<1x10x128xf32> to vector<1xf32>
    %26 = vector.shape_cast %25 : vector<1xf32> to vector<1x1x1xf32>
    %27 = vector.extract %26[0, 0, 0] : f32 from vector<1x1x1xf32>
    %28 = vector.broadcast %27 : f32 to vector<1x8x128xf32>
    %c0_10 = arith.constant 0 : index
    %c0_11 = arith.constant 0 : index
    %c0_12 = arith.constant 0 : index
    %29 = vector.load %arg4[%c0_10, %c0_11, %c0_12] : memref<1x8x128xf32, #tpu.memory_space<vmem>>, vector<1x8x128xf32>
    tpu.vector_store %arg4[%c0_10, %c0_11, %c0_12], %28 {strides = array<i32>} : memref<1x8x128xf32, #tpu.memory_space<vmem>>, vector<1x8x128xf32>,
    return
  }
  func.func @transform_0(%arg0: i32) -> (i32, i32) {
    %c0_i32 = arith.constant 0 : i32
    %c0_i32_0 = arith.constant 0 : i32
    return %c0_i32, %arg0 : i32, i32
  }
  func.func @transform_1(%arg0: i32) -> (i32, i32) {
    %c0_i32 = arith.constant 0 : i32
    %c0_i32_0 = arith.constant 0 : i32
    return %c0_i32, %arg0 : i32, i32
  }
  func.func @transform_2(%arg0: i32) -> (i32, i32) {
    %c0_i32 = arith.constant 0 : i32
    %c0_i32_0 = arith.constant 0 : i32
    %c0_i32_1 = arith.constant 0 : i32
    return %c0_i32, %c0_i32_0 : i32, i32
  }
  func.func @transform_3(%arg0: i32) -> (i32, i32, i32) {
    %c0_i32 = arith.constant 0 : i32
    %c0_i32_0 = arith.constant 0 : i32
    %c0_i32_1 = arith.constant 0 : i32
    return %arg0, %c0_i32, %c0_i32_0 : i32, i32, i32
  }
}

</mosaic_0001>

<llo_original>
// kernel: emd_loss.1
$region0: #{emd_loss.1}
  #allocation0 [shape = 'u32[]', space=smem, size = 0x4, offset = 0x4, fixed_abs, tag = 'smem constant byte address 0x4 - core index']
  #allocation1 [shape = 'u32[144,128]{1,0:T(1,128)}', space=vmem, size = 0x12000, scoped, tag = 'internal scratch']
  %s0 = inlined_call_operand.vmem [shape: f32[10,128], index: 0, kind: input, shape index: {}]
  %s1 = inlined_call_operand.vmem [shape: f32[10,128], index: 1, kind: input, shape index: {}]
  %s2 = inlined_call_operand.vmem [shape: f32[10,10], index: 2, kind: input, shape index: {}]
  %s3 = inlined_call_operand.vmem [shape: f32[1,8,128], index: 3, kind: output, shape index: {}]
  %s4 = sld [smem:[#allocation0]]
  $region22: #{emd_loss.1} parent=0
    _
  %s6 = ssub.s32 1, %s4
  %s7 = scalar_select 0, %s6, %s4
  // Predicated region
  $region2: #{emd_loss.1} parent=0 // pred_check
    _
  $region3: #{emd_loss.1} parent=0 // pred_check_branch
    %9 = sbr.rel (0) target = $region5
  $region4: #{emd_loss.1} parent=0 // pred_region
    _
  $region5: #{emd_loss.1} parent=0 // pred_fallthru
    _
  // Predicated region
  $region6: #{emd_loss.1} parent=0 // pred_check
    _
  $region7: #{emd_loss.1} parent=0 // pred_check_branch
    %11 = sbr.rel (0) target = $region9
  $region8: #{emd_loss.1} parent=0 // pred_region
    _
  $region9: #{emd_loss.1} parent=0 // pred_fallthru
    _
  // Predicated region
  $region10: #{emd_loss.1} parent=0 // pred_check
    _
  $region11: #{emd_loss.1} parent=0 // pred_check_branch
    %13 = sbr.rel (0) target = $region13
  $region12: #{emd_loss.1} parent=0 // pred_region
    _
  $region13: #{emd_loss.1} parent=0 // pred_fallthru
    _
  %v14 = vld [vmem:[%s0] sm:$0xff]
  %v15 = vld [vmem:[%s0 + $0x8] sm:$0x3]
  %v16 = vld [vmem:[%s1] sm:$0xff]
  %v17 = vld [vmem:[%s1 + $0x8] sm:$0x3]
  %vm18 = vcmask 1041408
  %v19 = vsel %vm18, %v15, -inf
  %v20 = vmax.f32 %v14, %v19
  %v21 = vrot.slane %v20, 4
  %v22 = vmax.f32 %v20, %v21
  %v23 = vrot.slane %v22, 2
  %v24 = vmax.f32 %v22, %v23
  %v25 = vrot.slane %v24, 1
  %v26 = vmax.f32 %v24, %v25
  %v27 = vsub.f32 %v14, %v26
  %v28 = vsub.f32 %v15, %v26
  %v29 = vmul.f32 %v27, 1.442695
  %v30 = vpow.pop %v29
  %v31 = vmul.f32 %v28, 1.442695
  %v32 = vpow.pop %v31
  %v33 = vsel %vm18, %v32, 0.0
  %v34 = vadd.f32 %v30, %v33
  %v35 = vrot.slane %v34, 4
  %v36 = vadd.f32 %v34, %v35
  %v37 = vrot.slane %v36, 2
  %v38 = vadd.f32 %v36, %v37
  %v39 = vrot.slane %v38, 1
  %v40 = vadd.f32 %v38, %v39
  %v41 = vrcp.pop %v40
  %v42 = vmul.f32 %v30, %v41
  %v43 = vmul.f32 %v32, %v41
  %v44 = vsel %vm18, %v17, -inf
  %v45 = vmax.f32 %v16, %v44
  %v46 = vrot.slane %v45, 4
  %v47 = vmax.f32 %v45, %v46
  %v48 = vrot.slane %v47, 2
  %v49 = vmax.f32 %v47, %v48
  %v50 = vrot.slane %v49, 1
  %v51 = vmax.f32 %v49, %v50
  %v52 = vsub.f32 %v16, %v51
  %v53 = vsub.f32 %v17, %v51
  %v54 = vmul.f32 %v52, 1.442695
  %v55 = vpow.pop %v54
  %v56 = vmul.f32 %v53, 1.442695
  %v57 = vpow.pop %v56
  %v58 = vsel %vm18, %v57, 0.0
  %v59 = vadd.f32 %v55, %v58
  %v60 = vrot.slane %v59, 4
  %v61 = vadd.f32 %v59, %v60
  %v62 = vrot.slane %v61, 2
  %v63 = vadd.f32 %v61, %v62
  %v64 = vrot.slane %v63, 1
  %v65 = vadd.f32 %v63, %v64
  %v66 = vrcp.pop %v65
  %v67 = vmul.f32 %v55, %v66
  %v68 = vmul.f32 %v57, %v66
  %v69 = vsub.f32 %v42, %v67
  %v70 = vsub.f32 %v43, %v68
  %v71 = vld [vmem:[%s2] sm:$0xff]
  %v72 = vld [vmem:[%s2 + $0x8] sm:$0x3]
  %vm73 = vcmask 80896
  %v75 = vsel %vm73, %v71, 0
  %v78 = vsel %vm73, %v72, 0
  %v81 = vsel %vm18, %v70, 0
  %83 = vmatprep.subr.mxu0 0.0
  %84 = vmatpush1.msra.mxu0 0.0
  %85 = vmatprep.subr.mxu0 0.0
  %86 = vmatpush1.msra.mxu0 0.0
  %87 = vmatprep.subr.mxu0 0.0
  %88 = vmatpush1.msra.mxu0 0.0
  %89 = vmatprep.subr.mxu0 0.0
  %90 = vmatpush1.msra.mxu0 0.0
  %91 = vmatprep.subr.mxu0 0.0
  %92 = vmatpush1.msra.mxu0 0.0
  %93 = vmatprep.subr.mxu0 0.0
  %94 = vmatpush1.msra.mxu0 0.0
  %95 = vmatprep.subr.mxu0 0.0
  %96 = vmatpush1.msra.mxu0 0.0
  %97 = vmatprep.subr.mxu0 0.0
  %98 = vmatpush1.msra.mxu0 0.0
  %99 = vmatprep.subr.mxu0 0.0
  %100 = vmatpush1.msra.mxu0 0.0
  %101 = vmatprep.subr.mxu0 0.0
  %102 = vmatpush1.msra.mxu0 0.0
  %103 = vmatprep.subr.mxu0 0.0
  %104 = vmatpush1.msra.mxu0 0.0
  %105 = vmatprep.subr.mxu0 0.0
  %106 = vmatpush1.msra.mxu0 0.0
  %107 = vmatprep.subr.mxu0 0.0
  %108 = vmatpush1.msra.mxu0 0.0
  %109 = vmatprep.subr.mxu0 0.0
  %110 = vmatpush1.msra.mxu0 0.0
  %111 = vmatprep.subr.mxu0 0.0
  %112 = vmatpush1.msra.mxu0 %v81
  %113 = vmatprep.subr.mxu0 0.0
  %114 = vmatpush1.msra.mxu0 %v69
  %115 = vmatprep.subr.mxu0 0.0
  %116 = vmatpush2.msra.mxu0 0.0
  %117 = vmatprep.subr.mxu0 0.0
  %118 = vmatpush2.msra.mxu0 0.0
  %119 = vmatprep.subr.mxu0 0.0
  %120 = vmatpush2.msra.mxu0 0.0
  %121 = vmatprep.subr.mxu0 0.0
  %122 = vmatpush2.msra.mxu0 0.0
  %123 = vmatprep.subr.mxu0 0.0
  %124 = vmatpush2.msra.mxu0 0.0
  %125 = vmatprep.subr.mxu0 0.0
  %126 = vmatpush2.msra.mxu0 0.0
  %127 = vmatprep.subr.mxu0 0.0
  %128 = vmatpush2.msra.mxu0 0.0
  %129 = vmatprep.subr.mxu0 0.0
  %130 = vmatpush2.msra.mxu0 0.0
  %131 = vmatprep.subr.mxu0 0.0
  %132 = vmatpush2.msra.mxu0 0.0
  %133 = vmatprep.subr.mxu0 0.0
  %134 = vmatpush2.msra.mxu0 0.0
  %135 = vmatprep.subr.mxu0 0.0
  %136 = vmatpush2.msra.mxu0 0.0
  %137 = vmatprep.subr.mxu0 0.0
  %138 = vmatpush2.msra.mxu0 0.0
  %139 = vmatprep.subr.mxu0 0.0
  %140 = vmatpush2.msra.mxu0 0.0
  %141 = vmatprep.subr.mxu0 0.0
  %142 = vmatpush2.msra.mxu0 0.0
  %143 = vmatprep.subr.mxu0 0.0
  %144 = vmatpush2.msra.mxu0 0.0
  %145 = vmatprep.subr.mxu0 0.0
  %146 = vmatpush2.msra.mxu0 0.0
  %147 = vmatprep.mubr.f32.mxu0 0.0
  %148 = vmatmul.mubr.f32.gmra.mxu0 %v75
  %v149 = vpop.f32.mrf.mxu0
  %v150 = vadd.f32 0.0, %v149
  %v151 = vpop.f32.mrf.mxu0
  %152 = vmatprep.mubr.f32.mxu0 0.0
  %153 = vmatmul.mubr.f32.gmra.mxu0 %v78
  %v154 = vpop.f32.mrf.mxu0
  %v155 = vadd.f32 0.0, %v154
  %v156 = vpop.f32.mrf.mxu0
  %157 = vdwg.mxu0
  %v158 = vmul.f32 %v150, %v150
  %v159 = vmul.f32 %v155, %v155
  %v160 = vsel %vm18, %v159, 0.0
  %v161 = vadd.f32 %v158, %v160
  %162 = vadd.xlane.f32.xlu0 %v161
  %v163 = vpop.xlane.xlu0 %162
  %v164 = vrot.slane %v163, 4
  %v165 = vadd.f32 %v163, %v164
  %v166 = vrot.slane %v165, 2
  %v167 = vadd.f32 %v165, %v166
  %v168 = vrot.slane %v167, 1
  %v169 = vadd.f32 %v167, %v168
  %s170 = vtos %v169
  %v171 = vstv %s170
  %172 = vst [vmem:[%s3] sm:$0xff] %v171
  // Predicated region
  $region14: #{emd_loss.1} parent=0 // pred_check
    _
  $region15: #{emd_loss.1} parent=0 // pred_check_branch
    %174 = sbr.rel (0) target = $region17
  $region16: #{emd_loss.1} parent=0 // pred_region
    _
  $region17: #{emd_loss.1} parent=0 // pred_fallthru
    _
  // Predicated region
  $region18: #{emd_loss.1} parent=0 // pred_check
    _
  $region19: #{emd_loss.1} parent=0 // pred_check_branch
    %176 = sbr.rel (0) target = $region21
  $region20: #{emd_loss.1} parent=0 // pred_region
    _
  $region21: #{emd_loss.1} parent=0 // pred_fallthru
    _

</llo_original>
